<compile_context>
chip_gen: v7x
topology: tpu7x:2x2x1
jax: 0.10.0
libtpu: 0.0.40
codegen_flags: <defaults>
</compile_context>

<pallas_src>
import functools

import jax
import jax.numpy as jnp
from jax.experimental import pallas as pl
from jax.experimental.pallas import tpu as pltpu


def _round_up(x, m):
    return (x + m - 1) // m * m


# ----------------------------------------------------------------------------
# Fused kernel: (conv3x3 + BN(eval) + ReLU) x 2 for one image, channel-major.
# ----------------------------------------------------------------------------
def _conv_block_kernel(x_ref, w1_ref, s1_ref, w2_ref, s2_ref, mask_ref,
                       o_ref, h1_ref, *, H, Wp, Cmid):
    """Per-image layout: channels on sublanes, flattened padded spatial grid
    (row pitch Wp, 2 zero rows top/bottom) on lanes -> (C, Mpad) with
    Mpad = (H+4)*Wp.  The 3x3 tap (dy, dx) over the whole image is the lane
    slice starting at (2+dy)*Wp + dx.  The 9 taps are stacked along the
    contraction (sublane) dim so each conv layer is a single bf16 matmul with
    K = 9*C, accumulated in f32 on the MXU; the im2col matrix never exists in
    HBM and the inter-layer activation never leaves VMEM."""
    M = H * Wp            # output lanes (includes the width-pad column slots)
    base = 2 * Wp         # lane offset of output position (y=0, x=0)

    def stacked_taps(load):
        cols = []
        for dy in (-1, 0, 1):
            for dx in (-1, 0, 1):
                start = base + dy * Wp + dx
                cols.append(load(start))                 # (C, M) bf16
        return jnp.concatenate(cols, axis=0)             # (9*C, M) bf16

    # -------- layer 1: conv3x3 (BN scale folded into w1) + shift + ReLU ------
    lhs1 = stacked_taps(lambda s: x_ref[0, :, s:s + M])              # (9*Cin, M)
    acc1 = jnp.dot(w1_ref[...], lhs1,
                   preferred_element_type=jnp.float32)               # (Cmid, M) f32
    # BN shift (conv bias folded in) + ReLU; zero the width-pad column slots so
    # they act as zero padding for layer 2's dx taps.
    h = (jnp.maximum(acc1 + s1_ref[...], 0.0) * mask_ref[...]).astype(jnp.bfloat16)

    # Stage the padded layer-1 activation entirely in VMEM (never touches HBM).
    h1_ref[:, 0:base] = jnp.zeros((Cmid, base), jnp.bfloat16)
    h1_ref[:, base + M:base + M + 2 * Wp] = jnp.zeros((Cmid, 2 * Wp), jnp.bfloat16)
    h1_ref[:, base:base + M] = h

    # -------- layer 2: conv3x3 (BN scale folded into w2) + shift + ReLU ------
    lhs2 = stacked_taps(lambda s: h1_ref[:, s:s + M])                # (9*Cmid, M)
    acc2 = jnp.dot(w2_ref[...], lhs2,
                   preferred_element_type=jnp.float32)               # (Cout, M) f32
    # Lane-dense store: last dim is the (padded) flattened spatial size; the
    # pad columns still hold junk here and are sliced off by the wrapper.
    o_ref[0, :, :] = jnp.maximum(acc2 + s2_ref[...], 0.0).astype(o_ref.dtype)


# ----------------------------------------------------------------------------
# Wrapper: NCHW float32 in / NCHW float32 out (matches PyTorch ConvBlock)
# ----------------------------------------------------------------------------
def conv_block_forward(params, x_nchw, eps=1e-5):
    N, Cin, H, W = x_nchw.shape
    Cmid = params["w1"].shape[-1]
    Cout = params["w2"].shape[-1]

    # Row pitch: >= W+1 (at least one zero column between rows for the dx=+1
    # tap) rounded to a multiple of 8; at H=W=16 this also makes M = H*Wp a
    # multiple of 128 -> fully dense output block.
    Wp = _round_up(W + 1, 8)
    M = H * Wp
    Mpad = (H + 4) * Wp

    # NCHW is already channel-major: zero-pad (2 rows top/bottom, Wp-W cols on
    # the right) and flatten the spatial dims into the lane axis.  bf16 MXU
    # operands; accumulation / BN shift / ReLU stay f32 in the kernel.
    xp = jnp.pad(x_nchw, ((0, 0), (0, 0), (2, 2), (0, Wp - W)))
    x_flat = xp.reshape(N, Cin, Mpad).astype(jnp.bfloat16)

    # Fold BN (inference) into the convs: y = (w*scale) (*) x + shift.  Weights
    # are shipped transposed + K-stacked as (Cout, 9*Cin), matching the tap
    # stacking order in the kernel (dy major, then dx, then input channel).
    def fold(w_hwio, bias, gamma, beta, mean, var):
        scale = gamma / jnp.sqrt(var + eps)                        # (Co,)
        w = (w_hwio * scale).reshape(-1, w_hwio.shape[-1]).T       # (Co, 9*Ci)
        shift = ((bias - mean) * scale + beta).reshape(-1, 1)      # (Co, 1)
        return w.astype(jnp.bfloat16), shift.astype(jnp.float32)

    w1, s1 = fold(params["w1"], params["b1"], params["gamma1"], params["beta1"],
                  params["mean1"], params["var1"])
    w2, s2 = fold(params["w2"], params["b2"], params["gamma2"], params["beta2"],
                  params["mean2"], params["var2"])

    # 0/1 mask over lanes that kills the width-pad column slots (tiny: (1, M)).
    colmask = (jnp.arange(M) % Wp < W).astype(jnp.float32).reshape(1, M)

    kernel = functools.partial(_conv_block_kernel, H=H, Wp=Wp, Cmid=Cmid)

    # Per-step VMEM footprint: double-buffered I/O blocks, weights/shifts/mask,
    # h1 scratch, live stacked taps + f32 accumulators; ~2x headroom on top.
    def _pad(r, c, bpe):
        return _round_up(max(r, 8), 8) * _round_up(max(c, 128), 128) * bpe
    est = (2 * _pad(Cin, Mpad, 2) + 2 * _pad(Cout, M, 4)
           + 2 * (_pad(Cmid, 9 * Cin, 2) + _pad(Cout, 9 * Cmid, 2))
           + 2 * (_pad(Cmid, 1, 4) + _pad(Cout, 1, 4) + _pad(1, M, 4))
           + _pad(Cmid, Mpad, 2)
           + 2 * _pad(9 * Cmid, M, 2) + 2 * _pad(max(Cmid, Cout), M, 4))
    vmem_limit = int(min(max(2 * est, 32 * 1024 * 1024), 96 * 1024 * 1024))

    # TODO(synk): for large H*W or wide channels (~256), add a row-band grid
    # axis (2-row halo) so the per-step footprint stays under v7x's 64 MiB VMEM,
    # and block several images per grid step to amortize the ~0.35us/step fixed
    # overhead at large N; at ConvBlock demo sizes neither is needed.
    out_flat = pl.pallas_call(
        kernel,
        out_shape=jax.ShapeDtypeStruct((N, Cout, M), jnp.float32),
        grid_spec=pltpu.PrefetchScalarGridSpec(
            num_scalar_prefetch=0,
            grid=(N,),
            in_specs=[
                pl.BlockSpec((1, Cin, Mpad), lambda n: (n, 0, 0)),
                pl.BlockSpec((Cmid, 9 * Cin), lambda n: (0, 0)),
                pl.BlockSpec((Cmid, 1), lambda n: (0, 0)),
                pl.BlockSpec((Cout, 9 * Cmid), lambda n: (0, 0)),
                pl.BlockSpec((Cout, 1), lambda n: (0, 0)),
                pl.BlockSpec((1, M), lambda n: (0, 0)),
            ],
            out_specs=pl.BlockSpec((1, Cout, M), lambda n: (n, 0, 0)),
            scratch_shapes=[pltpu.VMEM((Cmid, Mpad), jnp.bfloat16)],
        ),
        compiler_params=pltpu.CompilerParams(
            dimension_semantics=("parallel",),
            vmem_limit_bytes=vmem_limit),
    )(x_flat, w1, s1, w2, s2, colmask)

    # Drop the width-pad columns; output is already NCHW.
    return out_flat.reshape(N, Cout, H, Wp)[:, :, :, :W]


# ----------------------------------------------------------------------------
# Parameters (PyTorch-equivalent, stored as HWIO) + pure-JAX reference
# ----------------------------------------------------------------------------
def init_conv_block_params(key, in_channel, out_channel):
    ks = jax.random.split(key, 6)
    p = {}
    p["w1"] = 0.1 * jax.random.normal(ks[0], (3, 3, in_channel, out_channel), jnp.float32)
    p["b1"] = 0.1 * jax.random.normal(ks[1], (out_channel,), jnp.float32)
    p["gamma1"] = 1.0 + 0.1 * jax.random.normal(ks[2], (out_channel,), jnp.float32)
    p["beta1"] = 0.1 * jax.random.normal(ks[3], (out_channel,), jnp.float32)
    p["mean1"] = 0.05 * jax.random.normal(ks[4], (out_channel,), jnp.float32)
    p["var1"] = 1.0 + 0.1 * jax.nn.softplus(jax.random.normal(ks[5], (out_channel,), jnp.float32))

    ks2 = jax.random.split(jax.random.fold_in(key, 1), 6)
    p["w2"] = 0.1 * jax.random.normal(ks2[0], (3, 3, out_channel, out_channel), jnp.float32)
    p["b2"] = 0.1 * jax.random.normal(ks2[1], (out_channel,), jnp.float32)
    p["gamma2"] = 1.0 + 0.1 * jax.random.normal(ks2[2], (out_channel,), jnp.float32)
    p["beta2"] = 0.1 * jax.random.normal(ks2[3], (out_channel,), jnp.float32)
    p["mean2"] = 0.05 * jax.random.normal(ks2[4], (out_channel,), jnp.float32)
    p["var2"] = 1.0 + 0.1 * jax.nn.softplus(jax.random.normal(ks2[5], (out_channel,), jnp.float32))
    return p


def _ref_layer(x_nhwc, w_hwio, bias, gamma, beta, mean, var, eps=1e-5):
    y = jax.lax.conv_general_dilated(
        x_nhwc, w_hwio, window_strides=(1, 1), padding="SAME",
        dimension_numbers=("NHWC", "HWIO", "NHWC")) + bias
    y = gamma * (y - mean) / jnp.sqrt(var + eps) + beta
    return jnp.maximum(y, 0.0)


def conv_block_reference(params, x_nchw):
    x = jnp.transpose(x_nchw, (0, 2, 3, 1))
    h = _ref_layer(x, params["w1"], params["b1"], params["gamma1"],
                   params["beta1"], params["mean1"], params["var1"])
    h = _ref_layer(h, params["w2"], params["b2"], params["gamma2"],
                   params["beta2"], params["mean2"], params["var2"])
    return jnp.transpose(h, (0, 3, 1, 2))


if __name__ == "__main__":
    key = jax.random.PRNGKey(0)
    k_x, k_p = jax.random.split(key)

    N, Cin, Cout, H, W = 2, 4, 8, 16, 16
    x = jax.random.normal(k_x, (N, Cin, H, W), jnp.float32)   # NCHW, like PyTorch
    params = init_conv_block_params(k_p, Cin, Cout)

    out = jax.block_until_ready(jax.jit(conv_block_forward)(params, x))
    assert out.shape == (N, Cout, H, W), out.shape

    ref = jax.block_until_ready(conv_block_reference(params, x))
    max_err = float(jnp.abs(out - ref).max())
    # bf16 MXU operands -> relaxed tolerance vs the f32 reference (expected).
    assert jnp.allclose(out, ref, atol=5e-2, rtol=5e-2), max_err

    print("KERNEL_OK")
</pallas_src>

<mosaic_0001>
module attributes {stable_mosaic.version = 11 : i64} {
  func.func @_conv_block_kernel(%arg0: i32, %arg1: memref<1x4x480xbf16, #tpu.memory_space<vmem>>, %arg2: memref<8x36xbf16, #tpu.memory_space<vmem>>, %arg3: memref<8x1xf32, #tpu.memory_space<vmem>>, %arg4: memref<8x72xbf16, #tpu.memory_space<vmem>>, %arg5: memref<8x1xf32, #tpu.memory_space<vmem>>, %arg6: memref<1x384xf32, #tpu.memory_space<vmem>>, %arg7: memref<1x8x384xf32, #tpu.memory_space<vmem>>, %arg8: memref<8x480xbf16, #tpu.memory_space<vmem>>) attributes {dimension_semantics = [#tpu.dimension_semantics<parallel>], iteration_bounds = array<i64: 2>, scalar_prefetch = 0 : i64, scratch_operands = 1 : i64, tpu.core_type = #tpu.core_type<tc>, window_params = [{transform_indices = @transform_0, window_bounds = array<i64: 1, 4, 480>}, {pipeline_mode = #tpu.pipeline_mode<synchronous>, transform_indices = @transform_1, window_bounds = array<i64: 8, 36>}, {pipeline_mode = #tpu.pipeline_mode<synchronous>, transform_indices = @transform_2, window_bounds = array<i64: 8, 1>}, {pipeline_mode = #tpu.pipeline_mode<synchronous>, transform_indices = @transform_3, window_bounds = array<i64: 8, 72>}, {pipeline_mode = #tpu.pipeline_mode<synchronous>, transform_indices = @transform_4, window_bounds = array<i64: 8, 1>}, {pipeline_mode = #tpu.pipeline_mode<synchronous>, transform_indices = @transform_5, window_bounds = array<i64: 1, 384>}, {transform_indices = @transform_6, window_bounds = array<i64: 1, 8, 384>}]} {
    %c0 = arith.constant 0 : index
    %c0_0 = arith.constant 0 : index
    %c23 = arith.constant 23 : index
    %0 = vector.load %arg1[%c0, %c0_0, %c23] : memref<1x4x480xbf16, #tpu.memory_space<vmem>>, vector<1x4x384xbf16>
    %1 = vector.shape_cast %0 : vector<1x4x384xbf16> to vector<4x384xbf16>
    %c0_1 = arith.constant 0 : index
    %c0_2 = arith.constant 0 : index
    %c24 = arith.constant 24 : index
    %2 = vector.load %arg1[%c0_1, %c0_2, %c24] : memref<1x4x480xbf16, #tpu.memory_space<vmem>>, vector<1x4x384xbf16>
    %3 = vector.shape_cast %2 : vector<1x4x384xbf16> to vector<4x384xbf16>
    %c0_3 = arith.constant 0 : index
    %c0_4 = arith.constant 0 : index
    %c25 = arith.constant 25 : index
    %4 = vector.load %arg1[%c0_3, %c0_4, %c25] : memref<1x4x480xbf16, #tpu.memory_space<vmem>>, vector<1x4x384xbf16>
    %5 = vector.shape_cast %4 : vector<1x4x384xbf16> to vector<4x384xbf16>
    %c0_5 = arith.constant 0 : index
    %c0_6 = arith.constant 0 : index
    %c47 = arith.constant 47 : index
    %6 = vector.load %arg1[%c0_5, %c0_6, %c47] : memref<1x4x480xbf16, #tpu.memory_space<vmem>>, vector<1x4x384xbf16>
    %7 = vector.shape_cast %6 : vector<1x4x384xbf16> to vector<4x384xbf16>
    %c0_7 = arith.constant 0 : index
    %c0_8 = arith.constant 0 : index
    %c48 = arith.constant 48 : index
    %8 = vector.load %arg1[%c0_7, %c0_8, %c48] : memref<1x4x480xbf16, #tpu.memory_space<vmem>>, vector<1x4x384xbf16>
    %9 = vector.shape_cast %8 : vector<1x4x384xbf16> to vector<4x384xbf16>
    %c0_9 = arith.constant 0 : index
    %c0_10 = arith.constant 0 : index
    %c49 = arith.constant 49 : index
    %10 = vector.load %arg1[%c0_9, %c0_10, %c49] : memref<1x4x480xbf16, #tpu.memory_space<vmem>>, vector<1x4x384xbf16>
    %11 = vector.shape_cast %10 : vector<1x4x384xbf16> to vector<4x384xbf16>
    %c0_11 = arith.constant 0 : index
    %c0_12 = arith.constant 0 : index
    %c71 = arith.constant 71 : index
    %12 = vector.load %arg1[%c0_11, %c0_12, %c71] : memref<1x4x480xbf16, #tpu.memory_space<vmem>>, vector<1x4x384xbf16>
    %13 = vector.shape_cast %12 : vector<1x4x384xbf16> to vector<4x384xbf16>
    %c0_13 = arith.constant 0 : index
    %c0_14 = arith.constant 0 : index
    %c72 = arith.constant 72 : index
    %14 = vector.load %arg1[%c0_13, %c0_14, %c72] : memref<1x4x480xbf16, #tpu.memory_space<vmem>>, vector<1x4x384xbf16>
    %15 = vector.shape_cast %14 : vector<1x4x384xbf16> to vector<4x384xbf16>
    %c0_15 = arith.constant 0 : index
    %c0_16 = arith.constant 0 : index
    %c73 = arith.constant 73 : index
    %16 = vector.load %arg1[%c0_15, %c0_16, %c73] : memref<1x4x480xbf16, #tpu.memory_space<vmem>>, vector<1x4x384xbf16>
    %17 = vector.shape_cast %16 : vector<1x4x384xbf16> to vector<4x384xbf16>
    %18 = tpu.concatenate %1, %3, %5, %7, %9, %11, %13, %15, %17 in 0 : vector<4x384xbf16>, vector<4x384xbf16>, vector<4x384xbf16>, vector<4x384xbf16>, vector<4x384xbf16>, vector<4x384xbf16>, vector<4x384xbf16>, vector<4x384xbf16>, vector<4x384xbf16> -> vector<36x384xbf16>
    %c0_17 = arith.constant 0 : index
    %c0_18 = arith.constant 0 : index
    %19 = vector.load %arg2[%c0_17, %c0_18] : memref<8x36xbf16, #tpu.memory_space<vmem>>, vector<8x36xbf16>
    %cst = arith.constant dense<0.000000e+00> : vector<8x384xf32>
    %20 = tpu.matmul %19, %18, %cst {dimension_numbers = #tpu.dot_dimension_numbers<[1], [0], [0], [1], [0, 0, 1, 1], [], []>} : vector<8x36xbf16>, vector<36x384xbf16>, vector<8x384xf32> -> vector<8x384xf32>
    %c0_19 = arith.constant 0 : index
    %c0_20 = arith.constant 0 : index
    %21 = vector.load %arg3[%c0_19, %c0_20] : memref<8x1xf32, #tpu.memory_space<vmem>>, vector<8x1xf32>
    %22 = vector.broadcast %21 : vector<8x1xf32> to vector<8x384xf32>
    %23 = arith.addf %20, %22 : vector<8x384xf32>
    %cst_21 = arith.constant 0.000000e+00 : f32
    %24 = vector.broadcast %cst_21 : f32 to vector<8x384xf32>
    %25 = arith.maximumf %23, %24 : vector<8x384xf32>
    %c0_22 = arith.constant 0 : index
    %c0_23 = arith.constant 0 : index
    %26 = vector.load %arg6[%c0_22, %c0_23] : memref<1x384xf32, #tpu.memory_space<vmem>>, vector<1x384xf32>
    %27 = vector.broadcast %26 : vector<1x384xf32> to vector<8x384xf32>
    %28 = arith.mulf %25, %27 : vector<8x384xf32>
    %29 = arith.truncf %28 : vector<8x384xf32> to vector<8x384xbf16>
    %cst_24 = arith.constant 0.000000e+00 : bf16
    %30 = vector.broadcast %cst_24 : bf16 to vector<8x48xbf16>
    %c0_25 = arith.constant 0 : index
    %c0_26 = arith.constant 0 : index
    %31 = vector.load %arg8[%c0_25, %c0_26] : memref<8x480xbf16, #tpu.memory_space<vmem>>, vector<8x48xbf16>
    tpu.vector_store %arg8[%c0_25, %c0_26], %30 {strides = array<i32>} : memref<8x480xbf16, #tpu.memory_space<vmem>>, vector<8x48xbf16>,
    %cst_27 = arith.constant 0.000000e+00 : bf16
    %32 = vector.broadcast %cst_27 : bf16 to vector<8x48xbf16>
    %c0_28 = arith.constant 0 : index
    %c432 = arith.constant 432 : index
    %33 = vector.load %arg8[%c0_28, %c432] : memref<8x480xbf16, #tpu.memory_space<vmem>>, vector<8x48xbf16>
    tpu.vector_store %arg8[%c0_28, %c432], %32 {strides = array<i32>} : memref<8x480xbf16, #tpu.memory_space<vmem>>, vector<8x48xbf16>,
    %c0_29 = arith.constant 0 : index
    %c48_30 = arith.constant 48 : index
    %34 = vector.load %arg8[%c0_29, %c48_30] : memref<8x480xbf16, #tpu.memory_space<vmem>>, vector<8x384xbf16>
    tpu.vector_store %arg8[%c0_29, %c48_30], %29 {strides = array<i32>} : memref<8x480xbf16, #tpu.memory_space<vmem>>, vector<8x384xbf16>,
    %c0_31 = arith.constant 0 : index
    %c23_32 = arith.constant 23 : index
    %35 = vector.load %arg8[%c0_31, %c23_32] : memref<8x480xbf16, #tpu.memory_space<vmem>>, vector<8x384xbf16>
    %c0_33 = arith.constant 0 : index
    %c24_34 = arith.constant 24 : index
    %36 = vector.load %arg8[%c0_33, %c24_34] : memref<8x480xbf16, #tpu.memory_space<vmem>>, vector<8x384xbf16>
    %c0_35 = arith.constant 0 : index
    %c25_36 = arith.constant 25 : index
    %37 = vector.load %arg8[%c0_35, %c25_36] : memref<8x480xbf16, #tpu.memory_space<vmem>>, vector<8x384xbf16>
    %c0_37 = arith.constant 0 : index
    %c47_38 = arith.constant 47 : index
    %38 = vector.load %arg8[%c0_37, %c47_38] : memref<8x480xbf16, #tpu.memory_space<vmem>>, vector<8x384xbf16>
    %c0_39 = arith.constant 0 : index
    %c48_40 = arith.constant 48 : index
    %39 = vector.load %arg8[%c0_39, %c48_40] : memref<8x480xbf16, #tpu.memory_space<vmem>>, vector<8x384xbf16>
    %c0_41 = arith.constant 0 : index
    %c49_42 = arith.constant 49 : index
    %40 = vector.load %arg8[%c0_41, %c49_42] : memref<8x480xbf16, #tpu.memory_space<vmem>>, vector<8x384xbf16>
    %c0_43 = arith.constant 0 : index
    %c71_44 = arith.constant 71 : index
    %41 = vector.load %arg8[%c0_43, %c71_44] : memref<8x480xbf16, #tpu.memory_space<vmem>>, vector<8x384xbf16>
    %c0_45 = arith.constant 0 : index
    %c72_46 = arith.constant 72 : index
    %42 = vector.load %arg8[%c0_45, %c72_46] : memref<8x480xbf16, #tpu.memory_space<vmem>>, vector<8x384xbf16>
    %c0_47 = arith.constant 0 : index
    %c73_48 = arith.constant 73 : index
    %43 = vector.load %arg8[%c0_47, %c73_48] : memref<8x480xbf16, #tpu.memory_space<vmem>>, vector<8x384xbf16>
    %44 = tpu.concatenate %35, %36, %37, %38, %39, %40, %41, %42, %43 in 0 : vector<8x384xbf16>, vector<8x384xbf16>, vector<8x384xbf16>, vector<8x384xbf16>, vector<8x384xbf16>, vector<8x384xbf16>, vector<8x384xbf16>, vector<8x384xbf16>, vector<8x384xbf16> -> vector<72x384xbf16>
    %c0_49 = arith.constant 0 : index
    %c0_50 = arith.constant 0 : index
    %45 = vector.load %arg4[%c0_49, %c0_50] : memref<8x72xbf16, #tpu.memory_space<vmem>>, vector<8x72xbf16>
    %cst_51 = arith.constant dense<0.000000e+00> : vector<8x384xf32>
    %46 = tpu.matmul %45, %44, %cst_51 {dimension_numbers = #tpu.dot_dimension_numbers<[1], [0], [0], [1], [0, 0, 1, 1], [], []>} : vector<8x72xbf16>, vector<72x384xbf16>, vector<8x384xf32> -> vector<8x384xf32>
    %c0_52 = arith.constant 0 : index
    %c0_53 = arith.constant 0 : index
    %47 = vector.load %arg5[%c0_52, %c0_53] : memref<8x1xf32, #tpu.memory_space<vmem>>, vector<8x1xf32>
    %48 = vector.broadcast %47 : vector<8x1xf32> to vector<8x384xf32>
    %49 = arith.addf %46, %48 : vector<8x384xf32>
    %cst_54 = arith.constant 0.000000e+00 : f32
    %50 = vector.broadcast %cst_54 : f32 to vector<8x384xf32>
    %51 = arith.maximumf %49, %50 : vector<8x384xf32>
    %c0_55 = arith.constant 0 : index
    %c0_56 = arith.constant 0 : index
    %c0_57 = arith.constant 0 : index
    %52 = vector.load %arg7[%c0_55, %c0_56, %c0_57] : memref<1x8x384xf32, #tpu.memory_space<vmem>>, vector<1x8x384xf32>
    %53 = vector.shape_cast %52 : vector<1x8x384xf32> to vector<8x384xf32>
    %54 = vector.shape_cast %51 : vector<8x384xf32> to vector<1x8x384xf32>
    tpu.vector_store %arg7[%c0_55, %c0_56, %c0_57], %54 {strides = array<i32>} : memref<1x8x384xf32, #tpu.memory_space<vmem>>, vector<1x8x384xf32>,
    return
  }
  func.func @transform_0(%arg0: i32) -> (i32, i32, i32) {
    %c0_i32 = arith.constant 0 : i32
    %c0_i32_0 = arith.constant 0 : i32
    %c0_i32_1 = arith.constant 0 : i32
    return %arg0, %c0_i32, %c0_i32_0 : i32, i32, i32
  }
  func.func @transform_1(%arg0: i32) -> (i32, i32) {
    %c0_i32 = arith.constant 0 : i32
    %c0_i32_0 = arith.constant 0 : i32
    %c0_i32_1 = arith.constant 0 : i32
    return %c0_i32, %c0_i32_0 : i32, i32
  }
  func.func @transform_2(%arg0: i32) -> (i32, i32) {
    %c0_i32 = arith.constant 0 : i32
    %c0_i32_0 = arith.constant 0 : i32
    %c0_i32_1 = arith.constant 0 : i32
    return %c0_i32, %c0_i32_0 : i32, i32
  }
  func.func @transform_3(%arg0: i32) -> (i32, i32) {
    %c0_i32 = arith.constant 0 : i32
    %c0_i32_0 = arith.constant 0 : i32
    %c0_i32_1 = arith.constant 0 : i32
    return %c0_i32, %c0_i32_0 : i32, i32
  }
  func.func @transform_4(%arg0: i32) -> (i32, i32) {
    %c0_i32 = arith.constant 0 : i32
    %c0_i32_0 = arith.constant 0 : i32
    %c0_i32_1 = arith.constant 0 : i32
    return %c0_i32, %c0_i32_0 : i32, i32
  }
  func.func @transform_5(%arg0: i32) -> (i32, i32) {
    %c0_i32 = arith.constant 0 : i32
    %c0_i32_0 = arith.constant 0 : i32
    %c0_i32_1 = arith.constant 0 : i32
    return %c0_i32, %c0_i32_0 : i32, i32
  }
  func.func @transform_6(%arg0: i32) -> (i32, i32, i32) {
    %c0_i32 = arith.constant 0 : i32
    %c0_i32_0 = arith.constant 0 : i32
    %c0_i32_1 = arith.constant 0 : i32
    return %arg0, %c0_i32, %c0_i32_0 : i32, i32, i32
  }
}

</mosaic_0001>

<llo_original>
// kernel: conv_block_forward.1
$region0: #{conv_block_forward.1}
  #allocation0 [shape = 'u32[]', space=smem, size = 0x4, offset = 0x4, fixed_abs, tag = 'smem constant byte address 0x4 - core index']
  #allocation1 [shape = 'u32[144,128]{1,0:T(1,128)}', space=vmem, size = 0x12000, scoped, tag = 'internal scratch']
  #allocation2 [shape = 'bf16[8,480]{1,0:T(8,128)(2,1)}', space=vmem, size = 0x2000, scoped, tag = 'scratch operand']
  %s0 = inlined_call_operand.vmem [shape: bf16[2,4,480], index: 0, kind: input, shape index: {}]
  %s1 = inlined_call_operand.vmem [shape: bf16[8,36], index: 1, kind: input, shape index: {}]
  %s2 = inlined_call_operand.vmem [shape: f32[8,1], index: 2, kind: input, shape index: {}]
  %s3 = inlined_call_operand.vmem [shape: bf16[8,72], index: 3, kind: input, shape index: {}]
  %s4 = inlined_call_operand.vmem [shape: f32[8,1], index: 4, kind: input, shape index: {}]
  %s5 = inlined_call_operand.vmem [shape: f32[1,384], index: 5, kind: input, shape index: {}]
  %s6 = inlined_call_operand.vmem [shape: f32[2,8,384], index: 6, kind: output, shape index: {}]
  %s7 = sld [smem:[#allocation0]]
  $region57: #{conv_block_forward.1} parent=0
    _
  %s9 = ssub.s32 1, %s7
  %s10 = scalar_select 0, %s9, %s7
  loop: start=0, step=1, limit=4
  $region2: #{conv_block_forward.1} parent=0 // loop_pre_header
    _
  $region3: #{conv_block_forward.1} parent=0 // loop_header
    %s12 = sphi 0, %s16
    %p13 = scmp.ge.s32.totalorder %s12, 4
    %s22 = sphi 0, %s24
    %s25 = sphi 0, %s22
    %s26 = sphi 0, %s25
    %s42 = sphi 0, %s26
    %s46 = sphi 0, %s46
    %s48 = sphi 0, %s46
    %s49 = sphi 0, %s48
    %s63 = sphi 0, %s49
    %s67 = sphi 0, %s67
    %s69 = sphi 0, %s67
    %s70 = sphi 0, %s69
    %s84 = sphi 0, %s70
    %s88 = sphi 0, %s88
    %s90 = sphi 0, %s88
    %s91 = sphi 0, %s90
    %s105 = sphi 0, %s91
    %s109 = sphi 0, %s109
    %s111 = sphi 0, %s109
    %s112 = sphi 0, %s111
    %s126 = sphi 0, %s112
    %s130 = sphi 0, %s130
    %s132 = sphi 0, %s130
    %s133 = sphi 0, %s132
    %s147 = sphi 0, %s133
    %s153 = sphi 0, %s155
    %s156 = sphi 0, %s153
    %s157 = sphi 0, %s156
    %s173 = sphi 0, %s157
  $region4: #{conv_block_forward.1} parent=0 // loop_header_branch
    %15 = sbr.rel (%p13) target = $region8
  $region5: #{conv_block_forward.1} parent=0 // loop_body
    %s17 = ssub.s32 %s12, 1
    %s18 = ssub.s32 %s12, 2
    %s19 = sadd.s32 %s12, 1
    %s20 = ssub.s32 %s12, %s19
    %p21 = scmp.eq.s32.totalorder %s20, 0
    %s23 = sadd.s32 %s22, 1
    %s24 = scalar_select %p21, %s22, %s23
    %p27 = pneg %p21
    %p28 = scmp.eq.s32.totalorder %s12, 1
    %p29 = por %p27, %p28
    %p30 = scmp.ne.s32.totalorder %s22, %s25
    %p31 = scmp.eq.s32.totalorder %s12, 0
    %p32 = por %p30, %p31
    %p33 = scmp.ne.s32.totalorder %s22, %s25
    %p34 = scmp.eq.s32.totalorder %s17, 1
    %p35 = por %p33, %p34
    %p36 = scmp.ne.s32.totalorder %s25, %s26
    %p37 = scmp.eq.s32.totalorder %s17, 0
    %p38 = por %p36, %p37
    %p39 = scmp.ne.s32.totalorder %s25, %s26
    %p40 = scmp.eq.s32.totalorder %s18, 1
    %p41 = por %p39, %p40
    %p43 = scmp.ne.s32.totalorder %s26, %s42
    %p44 = scmp.eq.s32.totalorder %s18, 0
    %p45 = por %p43, %p44
    %s47 = sadd.s32 %s46, 1
    %p50 = scmp.eq.s32.totalorder %s12, 1
    %p51 = scmp.ne.s32.totalorder %s46, %s48
    %p52 = scmp.eq.s32.totalorder %s12, 0
    %p53 = por %p51, %p52
    %p54 = scmp.ne.s32.totalorder %s46, %s48
    %p55 = scmp.eq.s32.totalorder %s17, 1
    %p56 = por %p54, %p55
    %p57 = scmp.ne.s32.totalorder %s48, %s49
    %p58 = scmp.eq.s32.totalorder %s17, 0
    %p59 = por %p57, %p58
    %p60 = scmp.ne.s32.totalorder %s48, %s49
    %p61 = scmp.eq.s32.totalorder %s18, 1
    %p62 = por %p60, %p61
    %p64 = scmp.ne.s32.totalorder %s49, %s63
    %p65 = scmp.eq.s32.totalorder %s18, 0
    %p66 = por %p64, %p65
    %s68 = sadd.s32 %s67, 1
    %p71 = scmp.eq.s32.totalorder %s12, 1
    %p72 = scmp.ne.s32.totalorder %s67, %s69
    %p73 = scmp.eq.s32.totalorder %s12, 0
    %p74 = por %p72, %p73
    %p75 = scmp.ne.s32.totalorder %s67, %s69
    %p76 = scmp.eq.s32.totalorder %s17, 1
    %p77 = por %p75, %p76
    %p78 = scmp.ne.s32.totalorder %s69, %s70
    %p79 = scmp.eq.s32.totalorder %s17, 0
    %p80 = por %p78, %p79
    %p81 = scmp.ne.s32.totalorder %s69, %s70
    %p82 = scmp.eq.s32.totalorder %s18, 1
    %p83 = por %p81, %p82
    %p85 = scmp.ne.s32.totalorder %s70, %s84
    %p86 = scmp.eq.s32.totalorder %s18, 0
    %p87 = por %p85, %p86
    %s89 = sadd.s32 %s88, 1
    %p92 = scmp.eq.s32.totalorder %s12, 1
    %p93 = scmp.ne.s32.totalorder %s88, %s90
    %p94 = scmp.eq.s32.totalorder %s12, 0
    %p95 = por %p93, %p94
    %p96 = scmp.ne.s32.totalorder %s88, %s90
    %p97 = scmp.eq.s32.totalorder %s17, 1
    %p98 = por %p96, %p97
    %p99 = scmp.ne.s32.totalorder %s90, %s91
    %p100 = scmp.eq.s32.totalorder %s17, 0
    %p101 = por %p99, %p100
    %p102 = scmp.ne.s32.totalorder %s90, %s91
    %p103 = scmp.eq.s32.totalorder %s18, 1
    %p104 = por %p102, %p103
    %p106 = scmp.ne.s32.totalorder %s91, %s105
    %p107 = scmp.eq.s32.totalorder %s18, 0
    %p108 = por %p106, %p107
    %s110 = sadd.s32 %s109, 1
    %p113 = scmp.eq.s32.totalorder %s12, 1
    %p114 = scmp.ne.s32.totalorder %s109, %s111
    %p115 = scmp.eq.s32.totalorder %s12, 0
    %p116 = por %p114, %p115
    %p117 = scmp.ne.s32.totalorder %s109, %s111
    %p118 = scmp.eq.s32.totalorder %s17, 1
    %p119 = por %p117, %p118
    %p120 = scmp.ne.s32.totalorder %s111, %s112
    %p121 = scmp.eq.s32.totalorder %s17, 0
    %p122 = por %p120, %p121
    %p123 = scmp.ne.s32.totalorder %s111, %s112
    %p124 = scmp.eq.s32.totalorder %s18, 1
    %p125 = por %p123, %p124
    %p127 = scmp.ne.s32.totalorder %s112, %s126
    %p128 = scmp.eq.s32.totalorder %s18, 0
    %p129 = por %p127, %p128
    %s131 = sadd.s32 %s130, 1
    %p134 = scmp.eq.s32.totalorder %s12, 1
    %p135 = scmp.ne.s32.totalorder %s130, %s132
    %p136 = scmp.eq.s32.totalorder %s12, 0
    %p137 = por %p135, %p136
    %p138 = scmp.ne.s32.totalorder %s130, %s132
    %p139 = scmp.eq.s32.totalorder %s17, 1
    %p140 = por %p138, %p139
    %p141 = scmp.ne.s32.totalorder %s132, %s133
    %p142 = scmp.eq.s32.totalorder %s17, 0
    %p143 = por %p141, %p142
    %p144 = scmp.ne.s32.totalorder %s132, %s133
    %p145 = scmp.eq.s32.totalorder %s18, 1
    %p146 = por %p144, %p145
    %p148 = scmp.ne.s32.totalorder %s133, %s147
    %p149 = scmp.eq.s32.totalorder %s18, 0
    %p150 = por %p148, %p149
    %s151 = ssub.s32 %s12, %s19
    %p152 = scmp.eq.s32.totalorder %s151, 0
    %s154 = sadd.s32 %s153, 1
    %s155 = scalar_select %p152, %s153, %s154
    %p158 = pneg %p152
    %p159 = scmp.eq.s32.totalorder %s12, 1
    %p160 = por %p158, %p159
    %p161 = scmp.ne.s32.totalorder %s153, %s156
    %p162 = scmp.eq.s32.totalorder %s12, 0
    %p163 = por %p161, %p162
    %p164 = scmp.ne.s32.totalorder %s153, %s156
    %p165 = scmp.eq.s32.totalorder %s17, 1
    %p166 = por %p164, %p165
    %p167 = scmp.ne.s32.totalorder %s156, %s157
    %p168 = scmp.eq.s32.totalorder %s17, 0
    %p169 = por %p167, %p168
    %p170 = scmp.ne.s32.totalorder %s156, %s157
    %p171 = scmp.eq.s32.totalorder %s18, 1
    %p172 = por %p170, %p171
    %p174 = scmp.ne.s32.totalorder %s157, %s173
    %p175 = scmp.eq.s32.totalorder %s18, 0
    %p176 = por %p174, %p175
    %p177 = scmp.le.s32.totalorder 1, %s12
    %p178 = scmp.lt.s32.totalorder %s12, 3
    %p179 = pnand %p177, %p178
    %p180 = pneg %p179
    // Predicated region
    $region9: #{conv_block_forward.1} parent=5 // pred_check
      _
    $region10: #{conv_block_forward.1} parent=5 // pred_check_branch
      %182 = sbr.rel (%p179) target = $region12
    $region11: #{conv_block_forward.1} parent=5 // pred_region
      %s183 = ssub.s32 %s12, 1
      // Predicated region
      $region13: #{conv_block_forward.1} parent=11 // pred_check
        %p184 = pneg %p59
      $region14: #{conv_block_forward.1} parent=11 // pred_check_branch
        %186 = sbr.rel (%p184) target = $region16
      $region15: #{conv_block_forward.1} parent=11 // pred_region
        _
      $region16: #{conv_block_forward.1} parent=11 // pred_fallthru
        _
      // Predicated region
      $region17: #{conv_block_forward.1} parent=11 // pred_check
        %p187 = pneg %p80
      $region18: #{conv_block_forward.1} parent=11 // pred_check_branch
        %189 = sbr.rel (%p187) target = $region20
      $region19: #{conv_block_forward.1} parent=11 // pred_region
        _
      $region20: #{conv_block_forward.1} parent=11 // pred_fallthru
        _
      // Predicated region
      $region21: #{conv_block_forward.1} parent=11 // pred_check
        %p190 = pneg %p101
      $region22: #{conv_block_forward.1} parent=11 // pred_check_branch
        %192 = sbr.rel (%p190) target = $region24
      $region23: #{conv_block_forward.1} parent=11 // pred_region
        _
      $region24: #{conv_block_forward.1} parent=11 // pred_fallthru
        _
      // Predicated region
      $region25: #{conv_block_forward.1} parent=11 // pred_check
        %p193 = pneg %p122
      $region26: #{conv_block_forward.1} parent=11 // pred_check_branch
        %195 = sbr.rel (%p193) target = $region28
      $region27: #{conv_block_forward.1} parent=11 // pred_region
        _
      $region28: #{conv_block_forward.1} parent=11 // pred_fallthru
        _
      // Predicated region
      $region29: #{conv_block_forward.1} parent=11 // pred_check
        %p196 = pneg %p143
      $region30: #{conv_block_forward.1} parent=11 // pred_check_branch
        %198 = sbr.rel (%p196) target = $region32
      $region31: #{conv_block_forward.1} parent=11 // pred_region
        _
      $region32: #{conv_block_forward.1} parent=11 // pred_fallthru
        _
    $region12: #{conv_block_forward.1} parent=5 // pred_fallthru
      _
    %p199 = scmp.lt.s32.totalorder %s12, 2
    // Predicated region
    $region33: #{conv_block_forward.1} parent=5 // pred_check
      %p200 = pneg %p199
    $region34: #{conv_block_forward.1} parent=5 // pred_check_branch
      %202 = sbr.rel (%p200) target = $region36
    $region35: #{conv_block_forward.1} parent=5 // pred_region
      // Predicated region
      $region37: #{conv_block_forward.1} parent=35 // pred_check
        %p203 = pneg %p32
      $region38: #{conv_block_forward.1} parent=35 // pred_check_branch
        %205 = sbr.rel (%p203) target = $region40
      $region39: #{conv_block_forward.1} parent=35 // pred_region
        %p206 = scmp.lt.s32.totalorder %s12, 1
        %s207 = scalar_select %p206, %s12, 1
        %s208 = smul.addr %s207, 4
        %s209 = smul.addr %s208, 2
        %s210 = scalar_lea.vmem %s0, %s209
      $region40: #{conv_block_forward.1} parent=35 // pred_fallthru
        _
    $region36: #{conv_block_forward.1} parent=5 // pred_fallthru
      _
    %p211 = scmp.le.s32.totalorder 1, %s12
    %p212 = scmp.lt.s32.totalorder %s12, 3
    %p213 = pnand %p211, %p212
    %p214 = pneg %p213
    // Predicated region
    $region41: #{conv_block_forward.1} parent=5 // pred_check
      _
    $region42: #{conv_block_forward.1} parent=5 // pred_check_branch
      %216 = sbr.rel (%p213) target = $region44
    $region43: #{conv_block_forward.1} parent=5 // pred_region
      %s217 = ssub.s32 %s12, 1
      %p218 = scmp.lt.s32.totalorder %s17, 1
      %s219 = scalar_select %p218, %s17, 1
      %s220 = smul.addr %s219, 4
      %s221 = smul.addr %s220, 2
      %s222 = scalar_lea.vmem %s0, %s221
      %p223 = pneg %p38
      %p224 = pneg %p35
      %p225 = pneg %p59
      %p226 = pneg %p56
      %p227 = pneg %p80
      %p228 = pneg %p77
      %p229 = pneg %p101
      %p230 = pneg %p98
      %p231 = pneg %p122
      %p232 = pneg %p119
      %p233 = pneg %p143
      %p234 = pneg %p140
      %p235 = pneg %p169
      %p236 = pneg %p166
      %p237 = scmp.lt.s32.totalorder %s17, 1
      %s238 = scalar_select %p237, %s17, 1
      %s239 = smul.addr %s238, 3
      %s240 = smul.addr %s239, 8
      %s241 = scalar_lea.vmem %s6, %s240
      %p242 = scmp.lt.s32.totalorder %s17, 1
      %s243 = scalar_select %p242, %s17, 1
      %s244 = smul.addr %s243, 4
      %s245 = smul.addr %s244, 2
      %s246 = scalar_lea.vmem %s0, %s245
      %p247 = scmp.lt.s32.totalorder %s17, 1
      %s248 = scalar_select %p247, %s17, 1
      %s249 = smul.addr %s248, 3
      %s250 = smul.addr %s249, 8
      %s251 = scalar_lea.vmem %s6, %s250
      %v253 = vld [vmem:[%s246] sm:$0xff]
      %v255 = vcombine.high %v253, %v253
      %v257 = vunpack.c.l.s4 1983009808
      %v258 = vunpack.c.0.s8 %v257
      %v259 = vlaneseq
      %v260 = vshrl.u32 %v259, 7
      %v261 = vsub.s32 %v258, %v260
      %v262 = vrot.slane %v253, %v261
      %v264 = vunpack.c.l.s4 1983009808
      %v265 = vunpack.c.0.s8 %v264
      %v266 = vlaneseq
      %v267 = vshrl.u32 %v266, 7
      %v268 = vsub.s32 %v265, %v267
      %v269 = vrot.slane %v255, %v268
      %v270 = vcombine.high %v262, %v262
      %v271 = vcombine.high %v269, %v269
      %v272 = vcombine.low %v253, %v253
      %v274 = vunpack.c.l.s4 1983009808
      %v275 = vunpack.c.0.s8 %v274
      %v276 = vlaneseq
      %v277 = vshrl.u32 %v276, 7
      %v278 = vsub.s32 %v275, %v277
      %v279 = vrot.slane %v272, %v278
      %v280 = vcombine.high %v279, %v279
      %281 = vrot.lane.b32.xlu0 %v279, 127
      %v282 = vpop.permute.xlu0 %281
      %283 = vrot.lane.b32.xlu0 %v280, 127
      %v284 = vpop.permute.xlu0 %283
      %285 = vrot.lane.b32.xlu0 %v262, 127
      %v286 = vpop.permute.xlu0 %285
      %287 = vrot.lane.b32.xlu0 %v270, 127
      %v288 = vpop.permute.xlu0 %287
      %vm289 = vcmask 1039360
      %v290 = vsel %vm289, %v282, %v284
      %v291 = vsel %vm289, %v284, %v286
      %v292 = vsel %vm289, %v286, %v288
      %v293 = vcombine.low %v262, %v262
      %v294 = vcombine.low %v269, %v269
      %295 = vrot.lane.b32.xlu0 %v293, 126
      %v296 = vpop.permute.xlu0 %295
      %297 = vrot.lane.b32.xlu0 %v262, 126
      %v298 = vpop.permute.xlu0 %297
      %299 = vrot.lane.b32.xlu0 %v294, 126
      %v300 = vpop.permute.xlu0 %299
      %301 = vrot.lane.b32.xlu0 %v269, 126
      %v302 = vpop.permute.xlu0 %301
      %vm303 = vcmask 1031168
      %v304 = vsel %vm303, %v296, %v298
      %v305 = vsel %vm303, %v298, %v300
      %v306 = vsel %vm303, %v300, %v302
      %v307 = vcombine.low %v279, %v279
      %308 = vrot.lane.b32.xlu0 %v307, 104
      %v309 = vpop.permute.xlu0 %308
      %310 = vrot.lane.b32.xlu0 %v279, 104
      %v311 = vpop.permute.xlu0 %310
      %312 = vrot.lane.b32.xlu0 %v293, 104
      %v313 = vpop.permute.xlu0 %312
      %314 = vrot.lane.b32.xlu0 %v262, 104
      %v315 = vpop.permute.xlu0 %314
      %vm316 = vcmask 850944
      %v317 = vsel %vm316, %v309, %v311
      %v318 = vsel %vm316, %v311, %v313
      %v319 = vsel %vm316, %v313, %v315
      %320 = vrot.lane.b32.xlu0 %v262, 103
      %v321 = vpop.permute.xlu0 %320
      %322 = vrot.lane.b32.xlu0 %v270, 103
      %v323 = vpop.permute.xlu0 %322
      %324 = vrot.lane.b32.xlu0 %v269, 103
      %v325 = vpop.permute.xlu0 %324
      %326 = vrot.lane.b32.xlu0 %v271, 103
      %v327 = vpop.permute.xlu0 %326
      %vm328 = vcmask 842752
      %v329 = vsel %vm328, %v321, %v323
      %v330 = vsel %vm328, %v323, %v325
      %v331 = vsel %vm328, %v325, %v327
      %332 = vrot.lane.b32.xlu0 %v279, 102
      %v333 = vpop.permute.xlu0 %332
      %334 = vrot.lane.b32.xlu0 %v280, 102
      %v335 = vpop.permute.xlu0 %334
      %336 = vrot.lane.b32.xlu0 %v262, 102
      %v337 = vpop.permute.xlu0 %336
      %338 = vrot.lane.b32.xlu0 %v270, 102
      %v339 = vpop.permute.xlu0 %338
      %vm340 = vcmask 834560
      %v341 = vsel %vm340, %v333, %v335
      %v342 = vsel %vm340, %v335, %v337
      %v343 = vsel %vm340, %v337, %v339
      %344 = vrot.lane.b32.xlu0 %v293, 80
      %v345 = vpop.permute.xlu0 %344
      %346 = vrot.lane.b32.xlu0 %v262, 80
      %v347 = vpop.permute.xlu0 %346
      %348 = vrot.lane.b32.xlu0 %v294, 80
      %v349 = vpop.permute.xlu0 %348
      %350 = vrot.lane.b32.xlu0 %v269, 80
      %v351 = vpop.permute.xlu0 %350
      %vm352 = vcmask 654336
      %v353 = vsel %vm352, %v345, %v347
      %v354 = vsel %vm352, %v347, %v349
      %v355 = vsel %vm352, %v349, %v351
      %356 = vrot.lane.b32.xlu0 %v307, 79
      %v357 = vpop.permute.xlu0 %356
      %358 = vrot.lane.b32.xlu0 %v279, 79
      %v359 = vpop.permute.xlu0 %358
      %360 = vrot.lane.b32.xlu0 %v293, 79
      %v361 = vpop.permute.xlu0 %360
      %362 = vrot.lane.b32.xlu0 %v262, 79
      %v363 = vpop.permute.xlu0 %362
      %vm364 = vcmask 646144
      %v365 = vsel %vm364, %v357, %v359
      %v366 = vsel %vm364, %v359, %v361
      %v367 = vsel %vm364, %v361, %v363
      %368 = vrot.lane.b32.xlu0 %v262, 78
      %v369 = vpop.permute.xlu0 %368
      %370 = vrot.lane.b32.xlu0 %v270, 78
      %v371 = vpop.permute.xlu0 %370
      %372 = vrot.lane.b32.xlu0 %v269, 78
      %v373 = vpop.permute.xlu0 %372
      %374 = vrot.lane.b32.xlu0 %v271, 78
      %v375 = vpop.permute.xlu0 %374
      %vm376 = vcmask 637952
      %v377 = vsel %vm376, %v369, %v371
      %v378 = vsel %vm376, %v371, %v373
      %v379 = vsel %vm376, %v373, %v375
      %vm380 = vcmask 1041408
      %v383 = vsel %vm380, %v262, %v290
      %v386 = vsel %vm380, %v270, %v291
      %v389 = vsel %vm380, %v269, %v292
      %v392 = vsel %vm380, %v271, %v288
      %vm393 = vcmask 1043456
      %v395 = vsel %vm393, %v383, %v304
      %v397 = vsel %vm393, %v386, %v305
      %v399 = vsel %vm393, %v389, %v306
      %v401 = vsel %vm393, %v392, %v302
      %vm402 = vcmask 1045504
      %v404 = vsel %vm402, %v395, %v317
      %v406 = vsel %vm402, %v397, %v318
      %v408 = vsel %vm402, %v399, %v319
      %v410 = vsel %vm402, %v401, %v315
      %v413 = vsel %vm380, %v329, %v341
      %v416 = vsel %vm380, %v330, %v342
      %v419 = vsel %vm380, %v331, %v343
      %v422 = vsel %vm380, %v327, %v339
      %v424 = vsel %vm393, %v413, %v353
      %v426 = vsel %vm393, %v416, %v354
      %v428 = vsel %vm393, %v419, %v355
      %v430 = vsel %vm393, %v422, %v351
      %v432 = vsel %vm402, %v424, %v365
      %v434 = vsel %vm402, %v426, %v366
      %v436 = vsel %vm402, %v428, %v367
      %v438 = vsel %vm402, %v430, %v363
      %v439 = vld [vmem:[%s1] sm:$0xf]
      %v440 = vld [vmem:[%s2] sm:$0xff]
      %442 = vset.pattern.permute.xlu0 0
      %443 = vperm.xlu0 %442, %v440
      %v444 = vpop.permute.xlu0 %443
      %454 = vrot.lane.b32.xlu0 %v404, 105
      %v455 = vpop.permute.xlu0 %454
      %456 = vrot.lane.b32.xlu0 %v406, 105
      %v457 = vpop.permute.xlu0 %456
      %458 = vrot.lane.b32.xlu0 %v408, 105
      %v459 = vpop.permute.xlu0 %458
      %460 = vrot.lane.b32.xlu0 %v410, 105
      %v461 = vpop.permute.xlu0 %460
      %462 = vrot.lane.b32.xlu0 %v432, 105
      %v463 = vpop.permute.xlu0 %462
      %464 = vrot.lane.b32.xlu0 %v434, 105
      %v465 = vpop.permute.xlu0 %464
      %466 = vrot.lane.b32.xlu0 %v436, 105
      %v467 = vpop.permute.xlu0 %466
      %468 = vrot.lane.b32.xlu0 %v438, 105
      %v469 = vpop.permute.xlu0 %468
      %470 = vrot.lane.b32.xlu0 %v377, 105
      %v471 = vpop.permute.xlu0 %470
      %472 = vrot.lane.b32.xlu0 %v378, 105
      %v473 = vpop.permute.xlu0 %472
      %474 = vrot.lane.b32.xlu0 %v379, 105
      %v475 = vpop.permute.xlu0 %474
      %476 = vrot.lane.b32.xlu0 %v375, 105
      %v477 = vpop.permute.xlu0 %476
      %vm478 = vcmask 859136
      %v479 = vsel %vm478, %v455, %v457
      %v480 = vsel %vm478, %v457, %v459
      %v481 = vsel %vm478, %v459, %v461
      %v482 = vsel %vm478, %v463, %v465
      %v483 = vsel %vm478, %v465, %v467
      %v484 = vsel %vm478, %v467, %v469
      %v485 = vsel %vm478, %v471, %v473
      %v486 = vsel %vm478, %v473, %v475
      %v487 = vsel %vm478, %v475, %v477
      %vm494 = vcmask 293888
      %v496 = vsel %vm494, %v439, 0
      %v499 = vsel %vm380, %v485, 0
      %v502 = vsel %vm380, %v486, 0
      %v505 = vsel %vm380, %v487, 0
      %507 = vmatprep.subr.bf16.mxu0 %v480
      %508 = vmatpush1.bf16.msra.mxu0 %v479
      %509 = vmatprep.subr.bf16.mxu0 %v483
      %510 = vmatpush1.bf16.msra.mxu0 %v482
      %511 = vmatprep.subr.bf16.mxu0 %v502
      %512 = vmatpush1.bf16.msra.mxu0 %v499
      %513 = vmatprep.subr.bf16.mxu0 0
      %514 = vmatpush1.bf16.msra.mxu0 0
      %515 = vmatprep.subr.bf16.mxu0 0
      %516 = vmatpush1.bf16.msra.mxu0 0
      %517 = vmatprep.subr.bf16.mxu0 0
      %518 = vmatpush1.bf16.msra.mxu0 0
      %519 = vmatprep.subr.bf16.mxu0 0
      %520 = vmatpush1.bf16.msra.mxu0 0
      %521 = vmatprep.subr.bf16.mxu0 0
      %522 = vmatpush1.bf16.msra.mxu0 0
      %523 = vmatprep.subr.bf16.mxu0 0
      %524 = vmatpush1.bf16.msra.mxu0 0
      %525 = vmatprep.subr.bf16.mxu0 0
      %526 = vmatpush1.bf16.msra.mxu0 0
      %527 = vmatprep.subr.bf16.mxu0 0
      %528 = vmatpush1.bf16.msra.mxu0 0
      %529 = vmatprep.subr.bf16.mxu0 0
      %530 = vmatpush1.bf16.msra.mxu0 0
      %531 = vmatprep.subr.bf16.mxu0 0
      %532 = vmatpush1.bf16.msra.mxu0 0
      %533 = vmatprep.subr.bf16.mxu0 0
      %534 = vmatpush1.bf16.msra.mxu0 0
      %535 = vmatprep.subr.bf16.mxu0 0
      %536 = vmatpush1.bf16.msra.mxu0 0
      %537 = vmatprep.subr.bf16.mxu0 0
      %538 = vmatpush1.bf16.msra.mxu0 0
      %539 = vmatprep.mubr.bf16.mxu0 0
      %540 = vmatmul.mubr.bf16.gmra.mrb[0].mxu0 %v496
      %v541 = vpop.f32.mrb[0].mxu0
      %v542 = vadd.f32 %v444, %v541
      %v543 = vpop.f32.mrb[0].mxu0
      %v544 = vadd.f32 %v444, %v543
      %v545 = vpop.f32.mrb[0].mxu0
      %v546 = vpop.f32.mrb[0].mxu0
      %547 = vdwg.mxu0
      %548 = vmatprep.subr.bf16.mxu0 0
      %549 = vmatpush1.bf16.msra.mxu0 %v481
      %550 = vmatprep.subr.bf16.mxu0 0
      %551 = vmatpush1.bf16.msra.mxu0 %v484
      %552 = vmatprep.subr.bf16.mxu0 0
      %553 = vmatpush1.bf16.msra.mxu0 %v505
      %554 = vmatprep.subr.bf16.mxu0 0
      %555 = vmatpush1.bf16.msra.mxu0 0
      %556 = vmatprep.subr.bf16.mxu0 0
      %557 = vmatpush1.bf16.msra.mxu0 0
      %558 = vmatprep.subr.bf16.mxu0 0
      %559 = vmatpush1.bf16.msra.mxu0 0
      %560 = vmatprep.subr.bf16.mxu0 0
      %561 = vmatpush1.bf16.msra.mxu0 0
      %562 = vmatprep.subr.bf16.mxu0 0
      %563 = vmatpush1.bf16.msra.mxu0 0
      %564 = vmatprep.subr.bf16.mxu0 0
      %565 = vmatpush1.bf16.msra.mxu0 0
      %566 = vmatprep.subr.bf16.mxu0 0
      %567 = vmatpush1.bf16.msra.mxu0 0
      %568 = vmatprep.subr.bf16.mxu0 0
      %569 = vmatpush1.bf16.msra.mxu0 0
      %570 = vmatprep.subr.bf16.mxu0 0
      %571 = vmatpush1.bf16.msra.mxu0 0
      %572 = vmatprep.subr.bf16.mxu0 0
      %573 = vmatpush1.bf16.msra.mxu0 0
      %574 = vmatprep.subr.bf16.mxu0 0
      %575 = vmatpush1.bf16.msra.mxu0 0
      %576 = vmatprep.subr.bf16.mxu0 0
      %577 = vmatpush1.bf16.msra.mxu0 0
      %578 = vmatprep.subr.bf16.mxu0 0
      %579 = vmatpush1.bf16.msra.mxu0 0
      %580 = vmatprep.mubr.bf16.mxu0 0
      %581 = vmatmul.mubr.bf16.gmra.mrb[0].mxu0 %v496
      %v582 = vpop.f32.mrb[0].mxu0
      %v583 = vadd.f32 %v444, %v582
      %v584 = vpop.f32.mrb[0].mxu0
      %v585 = vpop.f32.mrb[0].mxu0
      %v586 = vpop.f32.mrb[0].mxu0
      %587 = vdwg.mxu0
      %v588 = vmax.f32 %v542, 0.0
      %v589 = vmax.f32 %v544, 0.0
      %v590 = vmax.f32 %v583, 0.0
      %v591 = vld [vmem:[%s5] sm:$0x7]
      %v593 = vlaneseq
      %v594 = vshrl.u32 %v593, 7
      %v595 = vsub.s32 0, %v594
      %v596 = vrot.slane %v591, %v595
      %v597 = vlaneseq
      %v598 = vshrl.u32 %v597, 7
      %v599 = vsub.s32 1, %v598
      %v600 = vrot.slane %v591, %v599
      %v601 = vlaneseq
      %v602 = vshrl.u32 %v601, 7
      %v603 = vsub.s32 2, %v602
      %v604 = vrot.slane %v591, %v603
      %v608 = vmul.f32 %v588, %v596
      %v609 = vmul.f32 %v589, %v600
      %v610 = vmul.f32 %v590, %v604
      %v611 = vpack.c.bf16 %v608, %v608
      %v612 = vpack.c.bf16 %v609, %v609
      %v613 = vpack.c.bf16 %v610, %v610
      %vm614 = vcmask 388096
      %615 = vst.msk [vmem:[#allocation2] sm:$0xf] %vm614, 0
      %vm616 = vcmask 781696
      %617 = vst.msk [vmem:[#allocation2 + $0xc] sm:$0xf] %vm616, 0
      %v621 = vunpack.c.l.b16 %v611
      %v622 = vunpack.c.l.b16 %v612
      %v623 = vunpack.c.l.b16 %v613
      %v624 = vpack.c.b16 %v622, %v621
      %v625 = vpack.c.b16 %v623, %v623
      %626 = vrot.lane.b32.xlu0 %v624, 48
      %v627 = vpop.permute.xlu0 %626
      %628 = vrot.lane.b32.xlu0 %v625, 48
      %v629 = vpop.permute.xlu0 %628
      %v630 = vrot.slane %v627, 4
      %v631 = vrot.slane %v629, 4
      %vm632 = vcmask 392192
      %v633 = vsel %vm632, %v630, %v627
      %vm634 = vcmask 1043456
      %v635 = vsel %vm634, %v630, %v631
      %v636 = vsel %vm632, %v635, %v629
      %vm639 = vcmask 1043840
      %vm640 = vcmask 1047556
      %vm641 = vmor %vm640, %vm639
      %642 = vst.msk [vmem:[#allocation2] sm:$0xff] %vm641, %v633
      %vm643 = vcmask 392196
      %vm644 = vmor %vm643, %vm393
      %645 = vst.msk [vmem:[#allocation2 + $0x8] sm:$0xff] %vm644, %v636
      %v646 = vld [vmem:[#allocation2] sm:$0xff]
      %v647 = vld [vmem:[#allocation2 + $0x8] sm:$0xff]
      %v650 = vunpack.c.l.b16 %v646
      %v651 = vunpack.c.h.b16 %v646
      %v652 = vunpack.c.l.b16 %v647
      %v653 = vunpack.c.h.b16 %v647
      %v654 = vpack.c.b16 %v650, %v650
      %v655 = vpack.c.b16 %v651, %v651
      %v656 = vpack.c.b16 %v652, %v652
      %v657 = vpack.c.b16 %v653, %v653
      %658 = vrot.lane.b32.xlu0 %v654, 127
      %v659 = vpop.permute.xlu0 %658
      %660 = vrot.lane.b32.xlu0 %v655, 127
      %v661 = vpop.permute.xlu0 %660
      %662 = vrot.lane.b32.xlu0 %v656, 127
      %v663 = vpop.permute.xlu0 %662
      %664 = vrot.lane.b32.xlu0 %v657, 127
      %v665 = vpop.permute.xlu0 %664
      %v666 = vsel %vm289, %v659, %v661
      %v667 = vsel %vm289, %v661, %v663
      %v668 = vsel %vm289, %v663, %v665
      %669 = vrot.lane.b32.xlu0 %v654, 126
      %v670 = vpop.permute.xlu0 %669
      %671 = vrot.lane.b32.xlu0 %v655, 126
      %v672 = vpop.permute.xlu0 %671
      %673 = vrot.lane.b32.xlu0 %v656, 126
      %v674 = vpop.permute.xlu0 %673
      %675 = vrot.lane.b32.xlu0 %v657, 126
      %v676 = vpop.permute.xlu0 %675
      %v677 = vsel %vm303, %v670, %v672
      %v678 = vsel %vm303, %v672, %v674
      %v679 = vsel %vm303, %v674, %v676
      %680 = vrot.lane.b32.xlu0 %v654, 104
      %v681 = vpop.permute.xlu0 %680
      %682 = vrot.lane.b32.xlu0 %v655, 104
      %v683 = vpop.permute.xlu0 %682
      %684 = vrot.lane.b32.xlu0 %v656, 104
      %v685 = vpop.permute.xlu0 %684
      %686 = vrot.lane.b32.xlu0 %v657, 104
      %v687 = vpop.permute.xlu0 %686
      %v688 = vsel %vm316, %v681, %v683
      %v689 = vsel %vm316, %v683, %v685
      %v690 = vsel %vm316, %v685, %v687
      %691 = vrot.lane.b32.xlu0 %v654, 103
      %v692 = vpop.permute.xlu0 %691
      %693 = vrot.lane.b32.xlu0 %v655, 103
      %v694 = vpop.permute.xlu0 %693
      %695 = vrot.lane.b32.xlu0 %v656, 103
      %v696 = vpop.permute.xlu0 %695
      %697 = vrot.lane.b32.xlu0 %v657, 103
      %v698 = vpop.permute.xlu0 %697
      %v699 = vsel %vm328, %v692, %v694
      %v700 = vsel %vm328, %v694, %v696
      %v701 = vsel %vm328, %v696, %v698
      %702 = vrot.lane.b32.xlu0 %v654, 102
      %v703 = vpop.permute.xlu0 %702
      %704 = vrot.lane.b32.xlu0 %v655, 102
      %v705 = vpop.permute.xlu0 %704
      %706 = vrot.lane.b32.xlu0 %v656, 102
      %v707 = vpop.permute.xlu0 %706
      %708 = vrot.lane.b32.xlu0 %v657, 102
      %v709 = vpop.permute.xlu0 %708
      %v710 = vsel %vm340, %v703, %v705
      %v711 = vsel %vm340, %v705, %v707
      %v712 = vsel %vm340, %v707, %v709
      %713 = vrot.lane.b32.xlu0 %v654, 80
      %v714 = vpop.permute.xlu0 %713
      %715 = vrot.lane.b32.xlu0 %v655, 80
      %v716 = vpop.permute.xlu0 %715
      %717 = vrot.lane.b32.xlu0 %v656, 80
      %v718 = vpop.permute.xlu0 %717
      %719 = vrot.lane.b32.xlu0 %v657, 80
      %v720 = vpop.permute.xlu0 %719
      %v721 = vsel %vm352, %v714, %v716
      %v722 = vsel %vm352, %v716, %v718
      %v723 = vsel %vm352, %v718, %v720
      %724 = vrot.lane.b32.xlu0 %v654, 79
      %v725 = vpop.permute.xlu0 %724
      %726 = vrot.lane.b32.xlu0 %v655, 79
      %v727 = vpop.permute.xlu0 %726
      %728 = vrot.lane.b32.xlu0 %v656, 79
      %v729 = vpop.permute.xlu0 %728
      %730 = vrot.lane.b32.xlu0 %v657, 79
      %v731 = vpop.permute.xlu0 %730
      %v732 = vsel %vm364, %v725, %v727
      %v733 = vsel %vm364, %v727, %v729
      %v734 = vsel %vm364, %v729, %v731
      %735 = vrot.lane.b32.xlu0 %v654, 78
      %v736 = vpop.permute.xlu0 %735
      %737 = vrot.lane.b32.xlu0 %v655, 78
      %v738 = vpop.permute.xlu0 %737
      %739 = vrot.lane.b32.xlu0 %v656, 78
      %v740 = vpop.permute.xlu0 %739
      %741 = vrot.lane.b32.xlu0 %v657, 78
      %v742 = vpop.permute.xlu0 %741
      %v743 = vsel %vm376, %v736, %v738
      %v744 = vsel %vm376, %v738, %v740
      %v745 = vsel %vm376, %v740, %v742
      %v748 = vsel %vm393, %v654, %v666
      %v751 = vsel %vm393, %v655, %v667
      %v754 = vsel %vm393, %v656, %v668
      %v757 = vsel %vm393, %v657, %v665
      %v760 = vsel %vm393, %v677, %v688
      %v763 = vsel %vm393, %v678, %v689
      %v766 = vsel %vm393, %v679, %v690
      %v769 = vsel %vm393, %v676, %v687
      %v772 = vsel %vm393, %v699, %v710
      %v775 = vsel %vm393, %v700, %v711
      %v778 = vsel %vm393, %v701, %v712
      %v781 = vsel %vm393, %v698, %v709
      %v784 = vsel %vm393, %v721, %v732
      %v787 = vsel %vm393, %v722, %v733
      %v790 = vsel %vm393, %v723, %v734
      %v793 = vsel %vm393, %v720, %v731
      %v794 = vld [vmem:[%s3] sm:$0xf]
      %v795 = vld [vmem:[%s4] sm:$0xff]
      %797 = vset.pattern.permute.xlu0 0
      %798 = vperm.xlu0 %797, %v795
      %v799 = vpop.permute.xlu0 %798
      %817 = vrot.lane.b32.xlu0 %v748, 105
      %v818 = vpop.permute.xlu0 %817
      %819 = vrot.lane.b32.xlu0 %v751, 105
      %v820 = vpop.permute.xlu0 %819
      %821 = vrot.lane.b32.xlu0 %v754, 105
      %v822 = vpop.permute.xlu0 %821
      %823 = vrot.lane.b32.xlu0 %v757, 105
      %v824 = vpop.permute.xlu0 %823
      %825 = vrot.lane.b32.xlu0 %v760, 105
      %v826 = vpop.permute.xlu0 %825
      %827 = vrot.lane.b32.xlu0 %v763, 105
      %v828 = vpop.permute.xlu0 %827
      %829 = vrot.lane.b32.xlu0 %v766, 105
      %v830 = vpop.permute.xlu0 %829
      %831 = vrot.lane.b32.xlu0 %v769, 105
      %v832 = vpop.permute.xlu0 %831
      %833 = vrot.lane.b32.xlu0 %v772, 105
      %v834 = vpop.permute.xlu0 %833
      %835 = vrot.lane.b32.xlu0 %v775, 105
      %v836 = vpop.permute.xlu0 %835
      %837 = vrot.lane.b32.xlu0 %v778, 105
      %v838 = vpop.permute.xlu0 %837
      %839 = vrot.lane.b32.xlu0 %v781, 105
      %v840 = vpop.permute.xlu0 %839
      %841 = vrot.lane.b32.xlu0 %v784, 105
      %v842 = vpop.permute.xlu0 %841
      %843 = vrot.lane.b32.xlu0 %v787, 105
      %v844 = vpop.permute.xlu0 %843
      %845 = vrot.lane.b32.xlu0 %v790, 105
      %v846 = vpop.permute.xlu0 %845
      %847 = vrot.lane.b32.xlu0 %v793, 105
      %v848 = vpop.permute.xlu0 %847
      %849 = vrot.lane.b32.xlu0 %v743, 105
      %v850 = vpop.permute.xlu0 %849
      %851 = vrot.lane.b32.xlu0 %v744, 105
      %v852 = vpop.permute.xlu0 %851
      %853 = vrot.lane.b32.xlu0 %v745, 105
      %v854 = vpop.permute.xlu0 %853
      %855 = vrot.lane.b32.xlu0 %v742, 105
      %v856 = vpop.permute.xlu0 %855
      %v857 = vsel %vm478, %v818, %v820
      %v858 = vsel %vm478, %v820, %v822
      %v859 = vsel %vm478, %v822, %v824
      %v860 = vsel %vm478, %v826, %v828
      %v861 = vsel %vm478, %v828, %v830
      %v862 = vsel %vm478, %v830, %v832
      %v863 = vsel %vm478, %v834, %v836
      %v864 = vsel %vm478, %v836, %v838
      %v865 = vsel %vm478, %v838, %v840
      %v866 = vsel %vm478, %v842, %v844
      %v867 = vsel %vm478, %v844, %v846
      %v868 = vsel %vm478, %v846, %v848
      %v869 = vsel %vm478, %v850, %v852
      %v870 = vsel %vm478, %v852, %v854
      %v871 = vsel %vm478, %v854, %v856
      %vm884 = vcmask 588800
      %v886 = vsel %vm884, %v794, 0
      %v889 = vsel %vm393, %v869, 0
      %v892 = vsel %vm393, %v870, 0
      %v895 = vsel %vm393, %v871, 0
      %897 = vmatprep.subr.bf16.mxu0 %v858
      %898 = vmatpush1.bf16.msra.mxu0 %v857
      %899 = vmatprep.subr.bf16.mxu0 %v861
      %900 = vmatpush1.bf16.msra.mxu0 %v860
      %901 = vmatprep.subr.bf16.mxu0 %v864
      %902 = vmatpush1.bf16.msra.mxu0 %v863
      %903 = vmatprep.subr.bf16.mxu0 %v867
      %904 = vmatpush1.bf16.msra.mxu0 %v866
      %905 = vmatprep.subr.bf16.mxu0 %v892
      %906 = vmatpush1.bf16.msra.mxu0 %v889
      %907 = vmatprep.subr.bf16.mxu0 0
      %908 = vmatpush1.bf16.msra.mxu0 0
      %909 = vmatprep.subr.bf16.mxu0 0
      %910 = vmatpush1.bf16.msra.mxu0 0
      %911 = vmatprep.subr.bf16.mxu0 0
      %912 = vmatpush1.bf16.msra.mxu0 0
      %913 = vmatprep.subr.bf16.mxu0 0
      %914 = vmatpush1.bf16.msra.mxu0 0
      %915 = vmatprep.subr.bf16.mxu0 0
      %916 = vmatpush1.bf16.msra.mxu0 0
      %917 = vmatprep.subr.bf16.mxu0 0
      %918 = vmatpush1.bf16.msra.mxu0 0
      %919 = vmatprep.subr.bf16.mxu0 0
      %920 = vmatpush1.bf16.msra.mxu0 0
      %921 = vmatprep.subr.bf16.mxu0 0
      %922 = vmatpush1.bf16.msra.mxu0 0
      %923 = vmatprep.subr.bf16.mxu0 0
      %924 = vmatpush1.bf16.msra.mxu0 0
      %925 = vmatprep.subr.bf16.mxu0 0
      %926 = vmatpush1.bf16.msra.mxu0 0
      %927 = vmatprep.subr.bf16.mxu0 0
      %928 = vmatpush1.bf16.msra.mxu0 0
      %929 = vmatprep.mubr.bf16.mxu0 0
      %930 = vmatmul.mubr.bf16.gmra.mrb[0].mxu0 %v886
      %v931 = vpop.f32.mrb[0].mxu0
      %v932 = vadd.f32 %v799, %v931
      %v933 = vpop.f32.mrb[0].mxu0
      %v934 = vadd.f32 %v799, %v933
      %v935 = vpop.f32.mrb[0].mxu0
      %v936 = vpop.f32.mrb[0].mxu0
      %937 = vdwg.mxu0
      %938 = vmatprep.subr.bf16.mxu0 0
      %939 = vmatpush1.bf16.msra.mxu0 %v859
      %940 = vmatprep.subr.bf16.mxu0 0
      %941 = vmatpush1.bf16.msra.mxu0 %v862
      %942 = vmatprep.subr.bf16.mxu0 0
      %943 = vmatpush1.bf16.msra.mxu0 %v865
      %944 = vmatprep.subr.bf16.mxu0 0
      %945 = vmatpush1.bf16.msra.mxu0 %v868
      %946 = vmatprep.subr.bf16.mxu0 0
      %947 = vmatpush1.bf16.msra.mxu0 %v895
      %948 = vmatprep.subr.bf16.mxu0 0
      %949 = vmatpush1.bf16.msra.mxu0 0
      %950 = vmatprep.subr.bf16.mxu0 0
      %951 = vmatpush1.bf16.msra.mxu0 0
      %952 = vmatprep.subr.bf16.mxu0 0
      %953 = vmatpush1.bf16.msra.mxu0 0
      %954 = vmatprep.subr.bf16.mxu0 0
      %955 = vmatpush1.bf16.msra.mxu0 0
      %956 = vmatprep.subr.bf16.mxu0 0
      %957 = vmatpush1.bf16.msra.mxu0 0
      %958 = vmatprep.subr.bf16.mxu0 0
      %959 = vmatpush1.bf16.msra.mxu0 0
      %960 = vmatprep.subr.bf16.mxu0 0
      %961 = vmatpush1.bf16.msra.mxu0 0
      %962 = vmatprep.subr.bf16.mxu0 0
      %963 = vmatpush1.bf16.msra.mxu0 0
      %964 = vmatprep.subr.bf16.mxu0 0
      %965 = vmatpush1.bf16.msra.mxu0 0
      %966 = vmatprep.subr.bf16.mxu0 0
      %967 = vmatpush1.bf16.msra.mxu0 0
      %968 = vmatprep.subr.bf16.mxu0 0
      %969 = vmatpush1.bf16.msra.mxu0 0
      %970 = vmatprep.mubr.bf16.mxu0 0
      %971 = vmatmul.mubr.bf16.gmra.mrb[0].mxu0 %v886
      %v972 = vpop.f32.mrb[0].mxu0
      %v973 = vadd.f32 %v799, %v972
      %v974 = vpop.f32.mrb[0].mxu0
      %v975 = vpop.f32.mrb[0].mxu0
      %v976 = vpop.f32.mrb[0].mxu0
      %977 = vdwg.mxu0
      %v978 = vmax.f32 %v932, 0.0
      %v979 = vmax.f32 %v934, 0.0
      %v980 = vmax.f32 %v973, 0.0
      %981 = vst [vmem:[%s251] sm:$0xff] %v978
      %982 = vst [vmem:[%s251 + $0x8] sm:$0xff] %v979
      %983 = vst [vmem:[%s251 + $0x10] sm:$0xff] %v980
      %p984 = scmp.lt.s32.totalorder %s17, 1
      %s985 = scalar_select %p984, %s17, 1
      %s986 = smul.addr %s985, 3
      %s987 = smul.addr %s986, 8
      %s988 = scalar_lea.vmem %s6, %s987
      // Predicated region
      $region45: #{conv_block_forward.1} parent=43 // pred_check
        %p989 = pneg %p166
      $region46: #{conv_block_forward.1} parent=43 // pred_check_branch
        %991 = sbr.rel (%p989) target = $region48
      $region47: #{conv_block_forward.1} parent=43 // pred_region
        _
      $region48: #{conv_block_forward.1} parent=43 // pred_fallthru
        _
    $region44: #{conv_block_forward.1} parent=5 // pred_fallthru
      _
    %p992 = scmp.le.s32.totalorder 2, %s12
    // Predicated region
    $region49: #{conv_block_forward.1} parent=5 // pred_check
      %p993 = pneg %p992
    $region50: #{conv_block_forward.1} parent=5 // pred_check_branch
      %995 = sbr.rel (%p993) target = $region52
    $region51: #{conv_block_forward.1} parent=5 // pred_region
      %s996 = ssub.s32 %s12, 2
      // Predicated region
      $region53: #{conv_block_forward.1} parent=51 // pred_check
        %p997 = pneg %p172
      $region54: #{conv_block_forward.1} parent=51 // pred_check_branch
        %999 = sbr.rel (%p997) target = $region56
      $region55: #{conv_block_forward.1} parent=51 // pred_region
        %p1000 = scmp.lt.s32.totalorder %s18, 1
        %s1001 = scalar_select %p1000, %s18, 1
        %s1002 = smul.addr %s1001, 3
        %s1003 = smul.addr %s1002, 8
        %s1004 = scalar_lea.vmem %s6, %s1003
      $region56: #{conv_block_forward.1} parent=51 // pred_fallthru
        _
    $region52: #{conv_block_forward.1} parent=5 // pred_fallthru
      _
  $region6: #{conv_block_forward.1} parent=0 // loop_footer
    %s16 = sadd.s32 1, %s12
  $region7: #{conv_block_forward.1} parent=0 // loop_footer_branch
    %11 = sbr.rel target = $region3
  $region8: #{conv_block_forward.1} parent=0 // loop_exit
    _

</llo_original>
